<compile_context>
chip_gen: v7x
topology: tpu7x:2x2x1
jax: 0.10.0
libtpu: 0.0.40
codegen_flags: <defaults>
</compile_context>

<pallas_src>
import functools

import jax
import jax.numpy as jnp
from jax import lax
from jax.experimental import pallas as pl
from jax.experimental.pallas import tpu as pltpu


def _deepsets_kernel(x_ref,
                     w1_ref, b1_ref, w2_ref, b2_ref,   # phi params
                     w3_ref, b3_ref, w4_ref, b4_ref,   # rho params
                     o_ref, acc_ref,
                     *, n_valid, tile_n):
    k = pl.program_id(0)

    @pl.when(k == 0)
    def _():
        acc_ref[...] = jnp.zeros_like(acc_ref)

    # phi layer 1 on this tile of set elements: (TN, Din) @ (Din, H) -> (TN, H)
    h = jnp.dot(x_ref[...], w1_ref[...], preferred_element_type=jnp.float32)
    h = jnp.maximum(h + b1_ref[...].astype(jnp.float32), 0.0)           # ReLU

    # Mask zero-padded rows (only compiled in when N % TN != 0): padded rows
    # would otherwise add relu(b1) to the pooled sum.
    if n_valid % tile_n != 0:
        row = k * tile_n + lax.broadcasted_iota(jnp.int32, h.shape, 0)
        h = jnp.where(row < n_valid, h, 0.0)

    # Partial permutation-invariant pooling (sum over the set axis).
    # phi's 2nd Linear is deferred to the finalize step (sum commutes with it),
    # so the (N,H)x(H,H) matmul collapses to a single (1,H)x(H,H) matmul.
    acc_ref[...] += jnp.sum(h, axis=0, keepdims=True)

    @pl.when(k == pl.num_programs(0) - 1)
    def _():
        # Finish phi:  pooled = (sum_i relu(x_i@W1+b1)) @ W2 + N*b2
        pooled = (jnp.dot(acc_ref[...], w2_ref[...],
                          preferred_element_type=jnp.float32)
                  + jnp.float32(n_valid) * b2_ref[...].astype(jnp.float32))
        # rho: Linear -> ReLU -> Linear
        g = jnp.maximum(
            jnp.dot(pooled, w3_ref[...], preferred_element_type=jnp.float32)
            + b3_ref[...].astype(jnp.float32), 0.0)
        out = (jnp.dot(g, w4_ref[...], preferred_element_type=jnp.float32)
               + b4_ref[...].astype(jnp.float32))
        o_ref[...] = out.astype(o_ref.dtype)


def deepsets_embedder(x, params, *, tile_n=None):
    """x: (N, Din). params: dict of phi/rho weights. Returns (Dout,)."""
    n, d_in = x.shape
    w1, b1, w2, b2 = params["w1"], params["b1"], params["w2"], params["b2"]
    w3, b3, w4, b4 = params["w3"], params["b3"], params["w4"], params["b4"]
    hidden = w1.shape[1]
    d_out = w4.shape[1]

    if tile_n is None:
        # Multiple of 8 (sublane granularity), capped so the double-buffered x
        # tiles stay far below the v7x 64 MiB / default 32 MiB scoped VMEM.
        tile_n = min(512, 8 * pl.cdiv(n, 8))

    # Pad the set axis up to a multiple of the tile (masked inside the kernel).
    n_pad = tile_n * pl.cdiv(n, tile_n)
    if n_pad != n:
        x = jnp.pad(x, ((0, n_pad - n), (0, 0)))
    grid = (n_pad // tile_n,)

    def const_spec(shape):
        return pl.BlockSpec(shape, lambda k, _s=shape: (0,) * len(_s))

    kernel = functools.partial(_deepsets_kernel, n_valid=n, tile_n=tile_n)

    out = pl.pallas_call(
        kernel,
        out_shape=jax.ShapeDtypeStruct((1, d_out), x.dtype),
        grid_spec=pltpu.PrefetchScalarGridSpec(
            num_scalar_prefetch=0,
            grid=grid,
            in_specs=[
                pl.BlockSpec((tile_n, d_in), lambda k: (k, 0)),   # x tile, streamed
                const_spec(w1.shape), const_spec(b1.shape),       # weights stay
                const_spec(w2.shape), const_spec(b2.shape),       # VMEM-resident
                const_spec(w3.shape), const_spec(b3.shape),
                const_spec(w4.shape), const_spec(b4.shape),
            ],
            out_specs=pl.BlockSpec((1, d_out), lambda k: (0, 0)),  # resident accumulator-style output
            scratch_shapes=[pltpu.VMEM((1, hidden), jnp.float32)],
        ),
        compiler_params=pltpu.CompilerParams(
            dimension_semantics=("arbitrary",),   # set axis is a reduction
        ),
    )(x, w1, b1, w2, b2, w3, b3, w4, b4)
    return out[0]   # (Dout,) — matches torch: sum over dim=0 then rho

    # TODO(synk): for a batched many-sets workload, add a leading "parallel"
    # batch grid axis (2 TCs on v7x) and emit a lane-dense (B, Dout) output slab.


def init_params(key, d_in, hidden, d_out):
    """Deterministic synthetic parameters (Kaiming-ish scaled normals)."""
    ks = jax.random.split(key, 8)

    def lin(kw, kb, fan_in, fan_out):
        w = jax.random.normal(kw, (fan_in, fan_out), jnp.float32) * (1.0 / jnp.sqrt(fan_in))
        b = jax.random.normal(kb, (1, fan_out), jnp.float32) * 0.01
        return w, b

    w1, b1 = lin(ks[0], ks[1], d_in, hidden)
    w2, b2 = lin(ks[2], ks[3], hidden, hidden)
    w3, b3 = lin(ks[4], ks[5], hidden, hidden)
    w4, b4 = lin(ks[6], ks[7], hidden, d_out)
    return dict(w1=w1, b1=b1, w2=w2, b2=b2, w3=w3, b3=b3, w4=w4, b4=b4)


def _reference(x, p):
    """Pure-JAX reference of the ORIGINAL (un-commuted) forward pass."""
    h = jnp.maximum(x @ p["w1"] + p["b1"], 0.0)
    phi = h @ p["w2"] + p["b2"]
    pooled = jnp.sum(phi, axis=0, keepdims=True)
    g = jnp.maximum(pooled @ p["w3"] + p["b3"], 0.0)
    return (g @ p["w4"] + p["b4"])[0]


if __name__ == "__main__":
    # 128-wide features keep every matmul lane-dense / MXU-friendly; N=72 with
    # TN=16 exercises the gridded, pipelined set-sum and the padding mask.
    N, D_IN, HIDDEN, D_OUT = 72, 128, 128, 128
    TILE_N = 16

    key = jax.random.PRNGKey(0)
    kx, kp = jax.random.split(key)
    x = jax.random.normal(kx, (N, D_IN), jnp.float32)
    params = init_params(kp, D_IN, HIDDEN, D_OUT)

    out = deepsets_embedder(x, params, tile_n=TILE_N)
    jax.block_until_ready(out)

    ref = _reference(x, params)
    assert out.shape == (D_OUT,), out.shape
    assert jnp.allclose(out, ref, atol=1e-3, rtol=1e-4), "mismatch vs reference"

    print("KERNEL_OK")
</pallas_src>

<mosaic_0001>
module attributes {stable_mosaic.version = 11 : i64} {
  func.func @_deepsets_kernel(%arg0: i32, %arg1: memref<16x128xf32, #tpu.memory_space<vmem>>, %arg2: memref<128x128xf32, #tpu.memory_space<vmem>>, %arg3: memref<1x128xf32, #tpu.memory_space<vmem>>, %arg4: memref<128x128xf32, #tpu.memory_space<vmem>>, %arg5: memref<1x128xf32, #tpu.memory_space<vmem>>, %arg6: memref<128x128xf32, #tpu.memory_space<vmem>>, %arg7: memref<1x128xf32, #tpu.memory_space<vmem>>, %arg8: memref<128x128xf32, #tpu.memory_space<vmem>>, %arg9: memref<1x128xf32, #tpu.memory_space<vmem>>, %arg10: memref<1x128xf32, #tpu.memory_space<vmem>>, %arg11: memref<1x128xf32, #tpu.memory_space<vmem>>) attributes {dimension_semantics = [#tpu.dimension_semantics<arbitrary>], iteration_bounds = array<i64: 5>, scalar_prefetch = 0 : i64, scratch_operands = 1 : i64, tpu.core_type = #tpu.core_type<tc>, window_params = [{transform_indices = @transform_0, window_bounds = array<i64: 16, 128>}, {pipeline_mode = #tpu.pipeline_mode<synchronous>, transform_indices = @transform_1, window_bounds = array<i64: 128, 128>}, {pipeline_mode = #tpu.pipeline_mode<synchronous>, transform_indices = @transform_2, window_bounds = array<i64: 1, 128>}, {pipeline_mode = #tpu.pipeline_mode<synchronous>, transform_indices = @transform_3, window_bounds = array<i64: 128, 128>}, {pipeline_mode = #tpu.pipeline_mode<synchronous>, transform_indices = @transform_4, window_bounds = array<i64: 1, 128>}, {pipeline_mode = #tpu.pipeline_mode<synchronous>, transform_indices = @transform_5, window_bounds = array<i64: 128, 128>}, {pipeline_mode = #tpu.pipeline_mode<synchronous>, transform_indices = @transform_6, window_bounds = array<i64: 1, 128>}, {pipeline_mode = #tpu.pipeline_mode<synchronous>, transform_indices = @transform_7, window_bounds = array<i64: 128, 128>}, {pipeline_mode = #tpu.pipeline_mode<synchronous>, transform_indices = @transform_8, window_bounds = array<i64: 1, 128>}, {pipeline_mode = #tpu.pipeline_mode<synchronous>, transform_indices = @transform_9, window_bounds = array<i64: 1, 128>}]} {
    %c0_i32 = arith.constant 0 : i32
    %0 = arith.cmpi eq, %arg0, %c0_i32 : i32
    %1 = arith.extui %0 : i1 to i32
    %c0_i32_0 = arith.constant 0 : i32
    %2 = arith.cmpi ne, %1, %c0_i32_0 : i32
    scf.if %2 {
      %cst_14 = arith.constant 0.000000e+00 : f32
      %27 = vector.broadcast %cst_14 : f32 to vector<1x128xf32>
      %c0_15 = arith.constant 0 : index
      %c0_16 = arith.constant 0 : index
      %28 = vector.load %arg11[%c0_15, %c0_16] : memref<1x128xf32, #tpu.memory_space<vmem>>, vector<1x128xf32>
      tpu.vector_store %arg11[%c0_15, %c0_16], %27 {strides = array<i32>} : memref<1x128xf32, #tpu.memory_space<vmem>>, vector<1x128xf32>,
    } else {
    }
    %c0 = arith.constant 0 : index
    %c0_1 = arith.constant 0 : index
    %3 = vector.load %arg1[%c0, %c0_1] : memref<16x128xf32, #tpu.memory_space<vmem>>, vector<16x128xf32>
    %c0_2 = arith.constant 0 : index
    %c0_3 = arith.constant 0 : index
    %4 = vector.load %arg2[%c0_2, %c0_3] : memref<128x128xf32, #tpu.memory_space<vmem>>, vector<128x128xf32>
    %cst = arith.constant dense<0.000000e+00> : vector<16x128xf32>
    %5 = tpu.matmul %3, %4, %cst {dimension_numbers = #tpu.dot_dimension_numbers<[1], [0], [0], [1], [0, 0, 1, 1], [], []>} : vector<16x128xf32>, vector<128x128xf32>, vector<16x128xf32> -> vector<16x128xf32>
    %c0_4 = arith.constant 0 : index
    %c0_5 = arith.constant 0 : index
    %6 = vector.load %arg3[%c0_4, %c0_5] : memref<1x128xf32, #tpu.memory_space<vmem>>, vector<1x128xf32>
    %7 = vector.broadcast %6 : vector<1x128xf32> to vector<16x128xf32>
    %8 = arith.addf %5, %7 : vector<16x128xf32>
    %cst_6 = arith.constant 0.000000e+00 : f32
    %9 = vector.broadcast %cst_6 : f32 to vector<16x128xf32>
    %10 = arith.maximumf %8, %9 : vector<16x128xf32>
    %c16_i32 = arith.constant 16 : i32
    %11 = arith.muli %arg0, %c16_i32 : i32
    %12 = tpu.iota {dimensions = array<i32: 0>} : vector<16x128xi32>
    %13 = vector.broadcast %11 : i32 to vector<16x128xi32>
    %14 = arith.addi %13, %12 : vector<16x128xi32>
    %c72_i32 = arith.constant 72 : i32
    %15 = vector.broadcast %c72_i32 : i32 to vector<16x128xi32>
    %16 = arith.cmpi slt, %14, %15 : vector<16x128xi32>
    %cst_7 = arith.constant 0.000000e+00 : f32
    %17 = vector.broadcast %cst_7 : f32 to vector<16x128xf32>
    %18 = arith.select %16, %10, %17 : vector<16x128xi1>, vector<16x128xf32>
    %c0_8 = arith.constant 0 : index
    %c0_9 = arith.constant 0 : index
    %19 = vector.load %arg11[%c0_8, %c0_9] : memref<1x128xf32, #tpu.memory_space<vmem>>, vector<1x128xf32>
    %cst_10 = arith.constant dense<0.000000e+00> : vector<128xf32>
    %20 = vector.multi_reduction <add>, %18, %cst_10 [0] : vector<16x128xf32> to vector<128xf32>
    %21 = vector.shape_cast %20 : vector<128xf32> to vector<1x128xf32>
    %22 = arith.addf %19, %21 : vector<1x128xf32>
    %c0_11 = arith.constant 0 : index
    %c0_12 = arith.constant 0 : index
    %23 = vector.load %arg11[%c0_11, %c0_12] : memref<1x128xf32, #tpu.memory_space<vmem>>, vector<1x128xf32>
    tpu.vector_store %arg11[%c0_11, %c0_12], %22 {strides = array<i32>} : memref<1x128xf32, #tpu.memory_space<vmem>>, vector<1x128xf32>,
    %c4_i32 = arith.constant 4 : i32
    %24 = arith.cmpi eq, %arg0, %c4_i32 : i32
    %25 = arith.extui %24 : i1 to i32
    %c0_i32_13 = arith.constant 0 : i32
    %26 = arith.cmpi ne, %25, %c0_i32_13 : i32
    scf.if %26 {
      %c0_14 = arith.constant 0 : index
      %c0_15 = arith.constant 0 : index
      %27 = vector.load %arg11[%c0_14, %c0_15] : memref<1x128xf32, #tpu.memory_space<vmem>>, vector<1x128xf32>
      %c0_16 = arith.constant 0 : index
      %c0_17 = arith.constant 0 : index
      %28 = vector.load %arg4[%c0_16, %c0_17] : memref<128x128xf32, #tpu.memory_space<vmem>>, vector<128x128xf32>
      %cst_18 = arith.constant dense<0.000000e+00> : vector<1x128xf32>
      %29 = tpu.matmul %27, %28, %cst_18 {dimension_numbers = #tpu.dot_dimension_numbers<[1], [0], [0], [1], [0, 0, 1, 1], [], []>} : vector<1x128xf32>, vector<128x128xf32>, vector<1x128xf32> -> vector<1x128xf32>
      %c0_19 = arith.constant 0 : index
      %c0_20 = arith.constant 0 : index
      %30 = vector.load %arg5[%c0_19, %c0_20] : memref<1x128xf32, #tpu.memory_space<vmem>>, vector<1x128xf32>
      %cst_21 = arith.constant 7.200000e+01 : f32
      %31 = vector.broadcast %cst_21 : f32 to vector<1x128xf32>
      %32 = arith.mulf %31, %30 : vector<1x128xf32>
      %33 = arith.addf %29, %32 : vector<1x128xf32>
      %c0_22 = arith.constant 0 : index
      %c0_23 = arith.constant 0 : index
      %34 = vector.load %arg6[%c0_22, %c0_23] : memref<128x128xf32, #tpu.memory_space<vmem>>, vector<128x128xf32>
      %cst_24 = arith.constant dense<0.000000e+00> : vector<1x128xf32>
      %35 = tpu.matmul %33, %34, %cst_24 {dimension_numbers = #tpu.dot_dimension_numbers<[1], [0], [0], [1], [0, 0, 1, 1], [], []>} : vector<1x128xf32>, vector<128x128xf32>, vector<1x128xf32> -> vector<1x128xf32>
      %c0_25 = arith.constant 0 : index
      %c0_26 = arith.constant 0 : index
      %36 = vector.load %arg7[%c0_25, %c0_26] : memref<1x128xf32, #tpu.memory_space<vmem>>, vector<1x128xf32>
      %37 = arith.addf %35, %36 : vector<1x128xf32>
      %cst_27 = arith.constant 0.000000e+00 : f32
      %38 = vector.broadcast %cst_27 : f32 to vector<1x128xf32>
      %39 = arith.maximumf %37, %38 : vector<1x128xf32>
      %c0_28 = arith.constant 0 : index
      %c0_29 = arith.constant 0 : index
      %40 = vector.load %arg8[%c0_28, %c0_29] : memref<128x128xf32, #tpu.memory_space<vmem>>, vector<128x128xf32>
      %cst_30 = arith.constant dense<0.000000e+00> : vector<1x128xf32>
      %41 = tpu.matmul %39, %40, %cst_30 {dimension_numbers = #tpu.dot_dimension_numbers<[1], [0], [0], [1], [0, 0, 1, 1], [], []>} : vector<1x128xf32>, vector<128x128xf32>, vector<1x128xf32> -> vector<1x128xf32>
      %c0_31 = arith.constant 0 : index
      %c0_32 = arith.constant 0 : index
      %42 = vector.load %arg9[%c0_31, %c0_32] : memref<1x128xf32, #tpu.memory_space<vmem>>, vector<1x128xf32>
      %43 = arith.addf %41, %42 : vector<1x128xf32>
      %c0_33 = arith.constant 0 : index
      %c0_34 = arith.constant 0 : index
      %44 = vector.load %arg10[%c0_33, %c0_34] : memref<1x128xf32, #tpu.memory_space<vmem>>, vector<1x128xf32>
      tpu.vector_store %arg10[%c0_33, %c0_34], %43 {strides = array<i32>} : memref<1x128xf32, #tpu.memory_space<vmem>>, vector<1x128xf32>,
    } else {
    }
    return
  }
  func.func @transform_0(%arg0: i32) -> (i32, i32) {
    %c0_i32 = arith.constant 0 : i32
    %c0_i32_0 = arith.constant 0 : i32
    return %arg0, %c0_i32 : i32, i32
  }
  func.func @transform_1(%arg0: i32) -> (i32, i32) {
    %c0_i32 = arith.constant 0 : i32
    %c0_i32_0 = arith.constant 0 : i32
    %c0_i32_1 = arith.constant 0 : i32
    return %c0_i32, %c0_i32_0 : i32, i32
  }
  func.func @transform_2(%arg0: i32) -> (i32, i32) {
    %c0_i32 = arith.constant 0 : i32
    %c0_i32_0 = arith.constant 0 : i32
    %c0_i32_1 = arith.constant 0 : i32
    return %c0_i32, %c0_i32_0 : i32, i32
  }
  func.func @transform_3(%arg0: i32) -> (i32, i32) {
    %c0_i32 = arith.constant 0 : i32
    %c0_i32_0 = arith.constant 0 : i32
    %c0_i32_1 = arith.constant 0 : i32
    return %c0_i32, %c0_i32_0 : i32, i32
  }
  func.func @transform_4(%arg0: i32) -> (i32, i32) {
    %c0_i32 = arith.constant 0 : i32
    %c0_i32_0 = arith.constant 0 : i32
    %c0_i32_1 = arith.constant 0 : i32
    return %c0_i32, %c0_i32_0 : i32, i32
  }
  func.func @transform_5(%arg0: i32) -> (i32, i32) {
    %c0_i32 = arith.constant 0 : i32
    %c0_i32_0 = arith.constant 0 : i32
    %c0_i32_1 = arith.constant 0 : i32
    return %c0_i32, %c0_i32_0 : i32, i32
  }
  func.func @transform_6(%arg0: i32) -> (i32, i32) {
    %c0_i32 = arith.constant 0 : i32
    %c0_i32_0 = arith.constant 0 : i32
    %c0_i32_1 = arith.constant 0 : i32
    return %c0_i32, %c0_i32_0 : i32, i32
  }
  func.func @transform_7(%arg0: i32) -> (i32, i32) {
    %c0_i32 = arith.constant 0 : i32
    %c0_i32_0 = arith.constant 0 : i32
    %c0_i32_1 = arith.constant 0 : i32
    return %c0_i32, %c0_i32_0 : i32, i32
  }
  func.func @transform_8(%arg0: i32) -> (i32, i32) {
    %c0_i32 = arith.constant 0 : i32
    %c0_i32_0 = arith.constant 0 : i32
    %c0_i32_1 = arith.constant 0 : i32
    return %c0_i32, %c0_i32_0 : i32, i32
  }
  func.func @transform_9(%arg0: i32) -> (i32, i32) {
    %c0_i32 = arith.constant 0 : i32
    %c0_i32_0 = arith.constant 0 : i32
    %c0_i32_1 = arith.constant 0 : i32
    return %c0_i32, %c0_i32_0 : i32, i32
  }
}

</mosaic_0001>

<llo_original>
// kernel: tpu_custom_call.1
$region0: #{tpu_custom_call.1}
  #allocation0 [shape = 'u32[]', space=smem, size = 0x4, offset = 0x4, fixed_abs, tag = 'smem constant byte address 0x4 - core index']
  #allocation1 [shape = 'u32[144,128]{1,0:T(1,128)}', space=vmem, size = 0x12000, scoped, tag = 'internal scratch']
  #allocation2 [shape = 'f32[1,128]{1,0:T(1,128)}', space=vmem, size = 0x200, scoped, tag = 'scratch operand']
  %s0 = inlined_call_operand.hbm [shape: f32[80,128], index: 0, kind: input, shape index: {}]
  %s1 = inlined_call_operand.hbm [shape: f32[128,128], index: 1, kind: input, shape index: {}]
  %s2 = inlined_call_operand.vmem [shape: f32[1,128], index: 2, kind: input, shape index: {}]
  %s3 = inlined_call_operand.hbm [shape: f32[128,128], index: 3, kind: input, shape index: {}]
  %s4 = inlined_call_operand.vmem [shape: f32[1,128], index: 4, kind: input, shape index: {}]
  %s5 = inlined_call_operand.hbm [shape: f32[128,128], index: 5, kind: input, shape index: {}]
  %s6 = inlined_call_operand.vmem [shape: f32[1,128], index: 6, kind: input, shape index: {}]
  %s7 = inlined_call_operand.hbm [shape: f32[128,128], index: 7, kind: input, shape index: {}]
  %s8 = inlined_call_operand.vmem [shape: f32[1,128], index: 8, kind: input, shape index: {}]
  %s9 = inlined_call_operand.hbm [shape: f32[1,128], index: 9, kind: output, shape index: {}]
  %s10 = sld [smem:[#allocation0]]
  $region97: #{tpu_custom_call.1} parent=0
    _
  %s12 = ssub.s32 1, %s10
  %s13 = scalar_select 0, %s12, %s10
  $region1: #{tpu_custom_call.1} parent=0
    #allocation3 [shape = 'u8[16384]{0}', space=vmem, size = 0x4000, scoped, tag = 'input window, operand 0']
    #allocation4 [shape = 's32[2]{0}', space=sflag, size = 0x8, scoped, tag = 'scoped memory for tpu_custom_call.1']
    #allocation5 [shape = 's32[2]{0}', space=sflag, size = 0x8, scoped, tag = 'scoped memory for tpu_custom_call.1']
    #allocation6 [shape = 'u8[65536]{0}', space=vmem, size = 0x10000, scoped, tag = 'input window, operand 1, single buffered']
    #allocation7 [shape = 's32[1]{0}', space=sflag, size = 0x4, scoped, tag = 'scoped memory for tpu_custom_call.1']
    #allocation8 [shape = 'u8[65536]{0}', space=vmem, size = 0x10000, scoped, tag = 'input window, operand 3, single buffered']
    #allocation9 [shape = 'u8[65536]{0}', space=vmem, size = 0x10000, scoped, tag = 'input window, operand 5, single buffered']
    #allocation10 [shape = 's32[1]{0}', space=sflag, size = 0x4, scoped, tag = 'scoped memory for tpu_custom_call.1']
    #allocation11 [shape = 'u8[65536]{0}', space=vmem, size = 0x10000, scoped, tag = 'input window, operand 7, single buffered']
    #allocation12 [shape = 'u8[512]{0}', space=vmem, size = 0x400, scoped, tag = 'output window, operand 0, single buffered']
    %14 = vsyncpa [#allocation4], 0
    %s15 = scalar_lea.sflag [#allocation4], 1
    %16 = vsyncpa %s15, 0
    %17 = vsyncpa [#allocation7], 0
    %18 = vsyncpa [#allocation10], 0
    %19 = vsyncpa [#allocation5], 0
    loop: start=0, step=1, limit=7
    $region2: #{tpu_custom_call.1} parent=1 // loop_pre_header
      _
    $region3: #{tpu_custom_call.1} parent=1 // loop_header
      %s21 = sphi 0, %s25
      %p22 = scmp.ge.s32.totalorder %s21, 7
      %s31 = sphi 0, %s33
      %s34 = sphi 0, %s31
      %s35 = sphi 0, %s34
      %s51 = sphi 0, %s35
      %s55 = sphi 0, %s55
      %s57 = sphi 0, %s55
      %s58 = sphi 0, %s57
      %s72 = sphi 0, %s58
      %s76 = sphi 0, %s76
      %s78 = sphi 0, %s76
      %s79 = sphi 0, %s78
      %s93 = sphi 0, %s79
      %s97 = sphi 0, %s97
      %s99 = sphi 0, %s97
      %s100 = sphi 0, %s99
      %s114 = sphi 0, %s100
      %s118 = sphi 0, %s118
      %s120 = sphi 0, %s118
      %s121 = sphi 0, %s120
      %s135 = sphi 0, %s121
      %s139 = sphi 0, %s139
      %s141 = sphi 0, %s139
      %s142 = sphi 0, %s141
      %s156 = sphi 0, %s142
      %s160 = sphi 0, %s160
      %s162 = sphi 0, %s160
      %s163 = sphi 0, %s162
      %s177 = sphi 0, %s163
      %s181 = sphi 0, %s181
      %s183 = sphi 0, %s181
      %s184 = sphi 0, %s183
      %s198 = sphi 0, %s184
      %s202 = sphi 0, %s202
      %s204 = sphi 0, %s202
      %s205 = sphi 0, %s204
      %s219 = sphi 0, %s205
      %s223 = sphi 0, %s223
      %s225 = sphi 0, %s223
      %s226 = sphi 0, %s225
      %s240 = sphi 0, %s226
    $region4: #{tpu_custom_call.1} parent=1 // loop_header_branch
      %24 = sbr.rel (%p22) target = $region8
    $region5: #{tpu_custom_call.1} parent=1 // loop_body
      %s26 = ssub.s32 %s21, 1
      %s27 = ssub.s32 %s21, 2
      %s28 = sadd.s32 %s21, 1
      %s29 = ssub.s32 %s21, %s28
      %p30 = scmp.eq.s32.totalorder %s29, 0
      %s32 = sadd.s32 %s31, 1
      %s33 = scalar_select %p30, %s31, %s32
      %p36 = pneg %p30
      %p37 = scmp.eq.s32.totalorder %s21, 4
      %p38 = por %p36, %p37
      %p39 = scmp.ne.s32.totalorder %s31, %s34
      %p40 = scmp.eq.s32.totalorder %s21, 0
      %p41 = por %p39, %p40
      %p42 = scmp.ne.s32.totalorder %s31, %s34
      %p43 = scmp.eq.s32.totalorder %s26, 4
      %p44 = por %p42, %p43
      %p45 = scmp.ne.s32.totalorder %s34, %s35
      %p46 = scmp.eq.s32.totalorder %s26, 0
      %p47 = por %p45, %p46
      %p48 = scmp.ne.s32.totalorder %s34, %s35
      %p49 = scmp.eq.s32.totalorder %s27, 4
      %p50 = por %p48, %p49
      %p52 = scmp.ne.s32.totalorder %s35, %s51
      %p53 = scmp.eq.s32.totalorder %s27, 0
      %p54 = por %p52, %p53
      %s56 = sadd.s32 %s55, 1
      %p59 = scmp.eq.s32.totalorder %s21, 4
      %p60 = scmp.ne.s32.totalorder %s55, %s57
      %p61 = scmp.eq.s32.totalorder %s21, 0
      %p62 = por %p60, %p61
      %p63 = scmp.ne.s32.totalorder %s55, %s57
      %p64 = scmp.eq.s32.totalorder %s26, 4
      %p65 = por %p63, %p64
      %p66 = scmp.ne.s32.totalorder %s57, %s58
      %p67 = scmp.eq.s32.totalorder %s26, 0
      %p68 = por %p66, %p67
      %p69 = scmp.ne.s32.totalorder %s57, %s58
      %p70 = scmp.eq.s32.totalorder %s27, 4
      %p71 = por %p69, %p70
      %p73 = scmp.ne.s32.totalorder %s58, %s72
      %p74 = scmp.eq.s32.totalorder %s27, 0
      %p75 = por %p73, %p74
      %s77 = sadd.s32 %s76, 1
      %p80 = scmp.eq.s32.totalorder %s21, 4
      %p81 = scmp.ne.s32.totalorder %s76, %s78
      %p82 = scmp.eq.s32.totalorder %s21, 0
      %p83 = por %p81, %p82
      %p84 = scmp.ne.s32.totalorder %s76, %s78
      %p85 = scmp.eq.s32.totalorder %s26, 4
      %p86 = por %p84, %p85
      %p87 = scmp.ne.s32.totalorder %s78, %s79
      %p88 = scmp.eq.s32.totalorder %s26, 0
      %p89 = por %p87, %p88
      %p90 = scmp.ne.s32.totalorder %s78, %s79
      %p91 = scmp.eq.s32.totalorder %s27, 4
      %p92 = por %p90, %p91
      %p94 = scmp.ne.s32.totalorder %s79, %s93
      %p95 = scmp.eq.s32.totalorder %s27, 0
      %p96 = por %p94, %p95
      %s98 = sadd.s32 %s97, 1
      %p101 = scmp.eq.s32.totalorder %s21, 4
      %p102 = scmp.ne.s32.totalorder %s97, %s99
      %p103 = scmp.eq.s32.totalorder %s21, 0
      %p104 = por %p102, %p103
      %p105 = scmp.ne.s32.totalorder %s97, %s99
      %p106 = scmp.eq.s32.totalorder %s26, 4
      %p107 = por %p105, %p106
      %p108 = scmp.ne.s32.totalorder %s99, %s100
      %p109 = scmp.eq.s32.totalorder %s26, 0
      %p110 = por %p108, %p109
      %p111 = scmp.ne.s32.totalorder %s99, %s100
      %p112 = scmp.eq.s32.totalorder %s27, 4
      %p113 = por %p111, %p112
      %p115 = scmp.ne.s32.totalorder %s100, %s114
      %p116 = scmp.eq.s32.totalorder %s27, 0
      %p117 = por %p115, %p116
      %s119 = sadd.s32 %s118, 1
      %p122 = scmp.eq.s32.totalorder %s21, 4
      %p123 = scmp.ne.s32.totalorder %s118, %s120
      %p124 = scmp.eq.s32.totalorder %s21, 0
      %p125 = por %p123, %p124
      %p126 = scmp.ne.s32.totalorder %s118, %s120
      %p127 = scmp.eq.s32.totalorder %s26, 4
      %p128 = por %p126, %p127
      %p129 = scmp.ne.s32.totalorder %s120, %s121
      %p130 = scmp.eq.s32.totalorder %s26, 0
      %p131 = por %p129, %p130
      %p132 = scmp.ne.s32.totalorder %s120, %s121
      %p133 = scmp.eq.s32.totalorder %s27, 4
      %p134 = por %p132, %p133
      %p136 = scmp.ne.s32.totalorder %s121, %s135
      %p137 = scmp.eq.s32.totalorder %s27, 0
      %p138 = por %p136, %p137
      %s140 = sadd.s32 %s139, 1
      %p143 = scmp.eq.s32.totalorder %s21, 4
      %p144 = scmp.ne.s32.totalorder %s139, %s141
      %p145 = scmp.eq.s32.totalorder %s21, 0
      %p146 = por %p144, %p145
      %p147 = scmp.ne.s32.totalorder %s139, %s141
      %p148 = scmp.eq.s32.totalorder %s26, 4
      %p149 = por %p147, %p148
      %p150 = scmp.ne.s32.totalorder %s141, %s142
      %p151 = scmp.eq.s32.totalorder %s26, 0
      %p152 = por %p150, %p151
      %p153 = scmp.ne.s32.totalorder %s141, %s142
      %p154 = scmp.eq.s32.totalorder %s27, 4
      %p155 = por %p153, %p154
      %p157 = scmp.ne.s32.totalorder %s142, %s156
      %p158 = scmp.eq.s32.totalorder %s27, 0
      %p159 = por %p157, %p158
      %s161 = sadd.s32 %s160, 1
      %p164 = scmp.eq.s32.totalorder %s21, 4
      %p165 = scmp.ne.s32.totalorder %s160, %s162
      %p166 = scmp.eq.s32.totalorder %s21, 0
      %p167 = por %p165, %p166
      %p168 = scmp.ne.s32.totalorder %s160, %s162
      %p169 = scmp.eq.s32.totalorder %s26, 4
      %p170 = por %p168, %p169
      %p171 = scmp.ne.s32.totalorder %s162, %s163
      %p172 = scmp.eq.s32.totalorder %s26, 0
      %p173 = por %p171, %p172
      %p174 = scmp.ne.s32.totalorder %s162, %s163
      %p175 = scmp.eq.s32.totalorder %s27, 4
      %p176 = por %p174, %p175
      %p178 = scmp.ne.s32.totalorder %s163, %s177
      %p179 = scmp.eq.s32.totalorder %s27, 0
      %p180 = por %p178, %p179
      %s182 = sadd.s32 %s181, 1
      %p185 = scmp.eq.s32.totalorder %s21, 4
      %p186 = scmp.ne.s32.totalorder %s181, %s183
      %p187 = scmp.eq.s32.totalorder %s21, 0
      %p188 = por %p186, %p187
      %p189 = scmp.ne.s32.totalorder %s181, %s183
      %p190 = scmp.eq.s32.totalorder %s26, 4
      %p191 = por %p189, %p190
      %p192 = scmp.ne.s32.totalorder %s183, %s184
      %p193 = scmp.eq.s32.totalorder %s26, 0
      %p194 = por %p192, %p193
      %p195 = scmp.ne.s32.totalorder %s183, %s184
      %p196 = scmp.eq.s32.totalorder %s27, 4
      %p197 = por %p195, %p196
      %p199 = scmp.ne.s32.totalorder %s184, %s198
      %p200 = scmp.eq.s32.totalorder %s27, 0
      %p201 = por %p199, %p200
      %s203 = sadd.s32 %s202, 1
      %p206 = scmp.eq.s32.totalorder %s21, 4
      %p207 = scmp.ne.s32.totalorder %s202, %s204
      %p208 = scmp.eq.s32.totalorder %s21, 0
      %p209 = por %p207, %p208
      %p210 = scmp.ne.s32.totalorder %s202, %s204
      %p211 = scmp.eq.s32.totalorder %s26, 4
      %p212 = por %p210, %p211
      %p213 = scmp.ne.s32.totalorder %s204, %s205
      %p214 = scmp.eq.s32.totalorder %s26, 0
      %p215 = por %p213, %p214
      %p216 = scmp.ne.s32.totalorder %s204, %s205
      %p217 = scmp.eq.s32.totalorder %s27, 4
      %p218 = por %p216, %p217
      %p220 = scmp.ne.s32.totalorder %s205, %s219
      %p221 = scmp.eq.s32.totalorder %s27, 0
      %p222 = por %p220, %p221
      %s224 = sadd.s32 %s223, 1
      %p227 = scmp.eq.s32.totalorder %s21, 4
      %p228 = scmp.ne.s32.totalorder %s223, %s225
      %p229 = scmp.eq.s32.totalorder %s21, 0
      %p230 = por %p228, %p229
      %p231 = scmp.ne.s32.totalorder %s223, %s225
      %p232 = scmp.eq.s32.totalorder %s26, 4
      %p233 = por %p231, %p232
      %p234 = scmp.ne.s32.totalorder %s225, %s226
      %p235 = scmp.eq.s32.totalorder %s26, 0
      %p236 = por %p234, %p235
      %p237 = scmp.ne.s32.totalorder %s225, %s226
      %p238 = scmp.eq.s32.totalorder %s27, 4
      %p239 = por %p237, %p238
      %p241 = scmp.ne.s32.totalorder %s226, %s240
      %p242 = scmp.eq.s32.totalorder %s27, 0
      %p243 = por %p241, %p242
      %p244 = scmp.le.s32.totalorder 1, %s21
      %p245 = scmp.lt.s32.totalorder %s21, 6
      %p246 = pnand %p244, %p245
      %p247 = pneg %p246
      // Predicated region
      $region9: #{tpu_custom_call.1} parent=5 // pred_check
        _
      $region10: #{tpu_custom_call.1} parent=5 // pred_check_branch
        %249 = sbr.rel (%p246) target = $region12
      $region11: #{tpu_custom_call.1} parent=5 // pred_region
        %s250 = ssub.s32 %s21, 1
        // Predicated region
        $region13: #{tpu_custom_call.1} parent=11 // pred_check
          %p251 = pneg %p68
        $region14: #{tpu_custom_call.1} parent=11 // pred_check_branch
          %253 = sbr.rel (%p251) target = $region16
        $region15: #{tpu_custom_call.1} parent=11 // pred_region
          %s255 = ssub.s32 2048, 2048
          %256 = vsyncadd [#allocation7], %s255
          %s257 = sshll.u32 [#allocation6], 4
          %s258 = int_to_ptr.vmem [resolvable:$true] %s257
          %263 = dma.hbm_to_vmem [thread:$0]  %s1, 2048, %s258, [#allocation7], 128, 128, 8
        $region16: #{tpu_custom_call.1} parent=11 // pred_fallthru
          _
        // Predicated region
        $region17: #{tpu_custom_call.1} parent=11 // pred_check
          %p264 = pneg %p89
        $region18: #{tpu_custom_call.1} parent=11 // pred_check_branch
          %266 = sbr.rel (%p264) target = $region20
        $region19: #{tpu_custom_call.1} parent=11 // pred_region
          _
        $region20: #{tpu_custom_call.1} parent=11 // pred_fallthru
          _
        // Predicated region
        $region21: #{tpu_custom_call.1} parent=11 // pred_check
          %p267 = pneg %p110
        $region22: #{tpu_custom_call.1} parent=11 // pred_check_branch
          %269 = sbr.rel (%p267) target = $region24
        $region23: #{tpu_custom_call.1} parent=11 // pred_region
          %s271 = ssub.s32 2048, 2048
          %272 = vsyncadd [#allocation7], %s271
          %s273 = sshll.u32 [#allocation8], 4
          %s274 = int_to_ptr.vmem [resolvable:$true] %s273
          %279 = dma.hbm_to_vmem [thread:$0]  %s3, 2048, %s274, [#allocation7], 128, 128, 8
        $region24: #{tpu_custom_call.1} parent=11 // pred_fallthru
          _
        // Predicated region
        $region25: #{tpu_custom_call.1} parent=11 // pred_check
          %p280 = pneg %p131
        $region26: #{tpu_custom_call.1} parent=11 // pred_check_branch
          %282 = sbr.rel (%p280) target = $region28
        $region27: #{tpu_custom_call.1} parent=11 // pred_region
          _
        $region28: #{tpu_custom_call.1} parent=11 // pred_fallthru
          _
        // Predicated region
        $region29: #{tpu_custom_call.1} parent=11 // pred_check
          %p283 = pneg %p152
        $region30: #{tpu_custom_call.1} parent=11 // pred_check_branch
          %285 = sbr.rel (%p283) target = $region32
        $region31: #{tpu_custom_call.1} parent=11 // pred_region
          %s287 = ssub.s32 2048, 2048
          %288 = vsyncadd [#allocation10], %s287
          %s289 = sshll.u32 [#allocation9], 4
          %s290 = int_to_ptr.vmem [resolvable:$true] %s289
          %295 = dma.hbm_to_vmem [thread:$0]  %s5, 2048, %s290, [#allocation10], 128, 128, 8
        $region32: #{tpu_custom_call.1} parent=11 // pred_fallthru
          _
        // Predicated region
        $region33: #{tpu_custom_call.1} parent=11 // pred_check
          %p296 = pneg %p173
        $region34: #{tpu_custom_call.1} parent=11 // pred_check_branch
          %298 = sbr.rel (%p296) target = $region36
        $region35: #{tpu_custom_call.1} parent=11 // pred_region
          _
        $region36: #{tpu_custom_call.1} parent=11 // pred_fallthru
          _
        // Predicated region
        $region37: #{tpu_custom_call.1} parent=11 // pred_check
          %p299 = pneg %p194
        $region38: #{tpu_custom_call.1} parent=11 // pred_check_branch
          %301 = sbr.rel (%p299) target = $region40
        $region39: #{tpu_custom_call.1} parent=11 // pred_region
          %s303 = ssub.s32 2048, 2048
          %304 = vsyncadd [#allocation10], %s303
          %s305 = sshll.u32 [#allocation11], 4
          %s306 = int_to_ptr.vmem [resolvable:$true] %s305
          %311 = dma.hbm_to_vmem [thread:$0]  %s7, 2048, %s306, [#allocation10], 128, 128, 8
        $region40: #{tpu_custom_call.1} parent=11 // pred_fallthru
          _
        // Predicated region
        $region41: #{tpu_custom_call.1} parent=11 // pred_check
          %p312 = pneg %p215
        $region42: #{tpu_custom_call.1} parent=11 // pred_check_branch
          %314 = sbr.rel (%p312) target = $region44
        $region43: #{tpu_custom_call.1} parent=11 // pred_region
          _
        $region44: #{tpu_custom_call.1} parent=11 // pred_fallthru
          _
      $region12: #{tpu_custom_call.1} parent=5 // pred_fallthru
        _
      %p315 = scmp.lt.s32.totalorder %s21, 5
      // Predicated region
      $region45: #{tpu_custom_call.1} parent=5 // pred_check
        %p316 = pneg %p315
      $region46: #{tpu_custom_call.1} parent=5 // pred_check_branch
        %318 = sbr.rel (%p316) target = $region48
      $region47: #{tpu_custom_call.1} parent=5 // pred_region
        // Predicated region
        $region49: #{tpu_custom_call.1} parent=47 // pred_check
          %p319 = pneg %p41
        $region50: #{tpu_custom_call.1} parent=47 // pred_check_branch
          %321 = sbr.rel (%p319) target = $region52
        $region51: #{tpu_custom_call.1} parent=47 // pred_region
          %s322 = sand.u32 %s31, 1
          %s323 = scalar_lea.sflag [#allocation4], %s322
          %s324 = sand.u32 %s31, 1
          %s325 = smul.addr %s324, 16
          %s326 = scalar_lea.vmem [#allocation3], %s325
          %s327 = smul.u32 2, %s21
          %s329 = ssub.s32 256, 256
          %330 = vsyncadd %s323, %s329
          %s331 = smul.addr %s327, 128
          %s332 = scalar_lea.hbm %s0, %s331
          %s333 = sshll.u32 %s326, 4
          %s334 = int_to_ptr.vmem [resolvable:$true] %s333
          %339 = dma.hbm_to_vmem [thread:$0]  %s332, 256, %s334, %s323, 128, 128, 8
        $region52: #{tpu_custom_call.1} parent=47 // pred_fallthru
          _
      $region48: #{tpu_custom_call.1} parent=5 // pred_fallthru
        _
      %p340 = scmp.le.s32.totalorder 1, %s21
      %p341 = scmp.lt.s32.totalorder %s21, 6
      %p342 = pnand %p340, %p341
      %p343 = pneg %p342
      // Predicated region
      $region53: #{tpu_custom_call.1} parent=5 // pred_check
        _
      $region54: #{tpu_custom_call.1} parent=5 // pred_check_branch
        %345 = sbr.rel (%p342) target = $region56
      $region55: #{tpu_custom_call.1} parent=5 // pred_region
        %s346 = ssub.s32 %s21, 1
        %s347 = sand.u32 %s34, 1
        %s348 = scalar_lea.sflag [#allocation4], %s347
        %s349 = sand.u32 %s34, 1
        %s350 = smul.addr %s349, 16
        %s351 = scalar_lea.vmem [#allocation3], %s350
        // Predicated region
        $region57: #{tpu_custom_call.1} parent=55 // pred_check
          %p352 = pneg %p47
        $region58: #{tpu_custom_call.1} parent=55 // pred_check_branch
          %354 = sbr.rel (%p352) target = $region60
        $region59: #{tpu_custom_call.1} parent=55 // pred_region
          %355 = dma.done %s348, 256
        $region60: #{tpu_custom_call.1} parent=55 // pred_fallthru
          _
        // Predicated region
        $region61: #{tpu_custom_call.1} parent=55 // pred_check
          %p356 = pneg %p68
        $region62: #{tpu_custom_call.1} parent=55 // pred_check_branch
          %358 = sbr.rel (%p356) target = $region64
        $region63: #{tpu_custom_call.1} parent=55 // pred_region
          %359 = dma.done [#allocation7], 2048
        $region64: #{tpu_custom_call.1} parent=55 // pred_fallthru
          _
        // Predicated region
        $region65: #{tpu_custom_call.1} parent=55 // pred_check
          %p360 = pneg %p110
        $region66: #{tpu_custom_call.1} parent=55 // pred_check_branch
          %362 = sbr.rel (%p360) target = $region68
        $region67: #{tpu_custom_call.1} parent=55 // pred_region
          %363 = dma.done [#allocation7], 2048
        $region68: #{tpu_custom_call.1} parent=55 // pred_fallthru
          _
        // Predicated region
        $region69: #{tpu_custom_call.1} parent=55 // pred_check
          %p364 = pneg %p152
        $region70: #{tpu_custom_call.1} parent=55 // pred_check_branch
          %366 = sbr.rel (%p364) target = $region72
        $region71: #{tpu_custom_call.1} parent=55 // pred_region
          %367 = dma.done [#allocation10], 2048
        $region72: #{tpu_custom_call.1} parent=55 // pred_fallthru
          _
        // Predicated region
        $region73: #{tpu_custom_call.1} parent=55 // pred_check
          %p368 = pneg %p194
        $region74: #{tpu_custom_call.1} parent=55 // pred_check_branch
          %370 = sbr.rel (%p368) target = $region76
        $region75: #{tpu_custom_call.1} parent=55 // pred_region
          %371 = dma.done [#allocation10], 2048
        $region76: #{tpu_custom_call.1} parent=55 // pred_fallthru
          _
        %s372 = sand.u32 %s34, 1
        %s373 = scalar_lea.sflag [#allocation4], %s372
        %s374 = sand.u32 %s34, 1
        %s375 = smul.addr %s374, 16
        %s376 = scalar_lea.vmem [#allocation3], %s375
        %p377 = pneg %p47
        %p378 = pneg %p44
        %p379 = pneg %p68
        %p380 = pneg %p65
        %p381 = pneg %p89
        %p382 = pneg %p86
        %p383 = pneg %p110
        %p384 = pneg %p107
        %p385 = pneg %p131
        %p386 = pneg %p128
        %p387 = pneg %p152
        %p388 = pneg %p149
        %p389 = pneg %p173
        %p390 = pneg %p170
        %p391 = pneg %p194
        %p392 = pneg %p191
        %p393 = pneg %p215
        %p394 = pneg %p212
        %p395 = pneg %p236
        %p396 = pneg %p233
        %s397 = smul.u32 2, %s26
        %p398 = scmp.eq.s32.totalorder %s26, 0
        // Predicated region
        $region77: #{tpu_custom_call.1} parent=55 // pred_check
          %p399 = pneg %p398
        $region78: #{tpu_custom_call.1} parent=55 // pred_check_branch
          %401 = sbr.rel (%p399) target = $region80
        $region79: #{tpu_custom_call.1} parent=55 // pred_region
          %402 = vst [vmem:[#allocation2] sm:$0x1] 0.0
        $region80: #{tpu_custom_call.1} parent=55 // pred_fallthru
          _
        %v403 = vld [vmem:[%s351] sm:$0xff]
        %v404 = vld [vmem:[%s351 + $0x8] sm:$0xff]
        %v405 = vld [vmem:[#allocation6] sm:$0xff]
        %v406 = vld [vmem:[#allocation6 + $0x8] sm:$0xff]
        %v407 = vld [vmem:[#allocation6 + $0x10] sm:$0xff]
        %v408 = vld [vmem:[#allocation6 + $0x18] sm:$0xff]
        %v409 = vld [vmem:[#allocation6 + $0x20] sm:$0xff]
        %v410 = vld [vmem:[#allocation6 + $0x28] sm:$0xff]
        %v411 = vld [vmem:[#allocation6 + $0x30] sm:$0xff]
        %v412 = vld [vmem:[#allocation6 + $0x38] sm:$0xff]
        %v413 = vld [vmem:[#allocation6 + $0x40] sm:$0xff]
        %v414 = vld [vmem:[#allocation6 + $0x48] sm:$0xff]
        %v415 = vld [vmem:[#allocation6 + $0x50] sm:$0xff]
        %v416 = vld [vmem:[#allocation6 + $0x58] sm:$0xff]
        %v417 = vld [vmem:[#allocation6 + $0x60] sm:$0xff]
        %v418 = vld [vmem:[#allocation6 + $0x68] sm:$0xff]
        %v419 = vld [vmem:[#allocation6 + $0x70] sm:$0xff]
        %v420 = vld [vmem:[#allocation6 + $0x78] sm:$0xff]
        %v421 = vld [vmem:[%s2] sm:$0x1]
        %v423 = vlaneseq
        %v424 = vshrl.u32 %v423, 7
        %v425 = vsub.s32 0, %v424
        %v426 = vrot.slane %v421, %v425
        %428 = vmatprep.subr.mxu0 0.0
        %429 = vmatpush1.msra.mxu0 %v405
        %430 = vmatprep.subr.mxu0 0.0
        %431 = vmatpush1.msra.mxu0 %v406
        %432 = vmatprep.subr.mxu0 0.0
        %433 = vmatpush1.msra.mxu0 %v407
        %434 = vmatprep.subr.mxu0 0.0
        %435 = vmatpush1.msra.mxu0 %v408
        %436 = vmatprep.subr.mxu0 0.0
        %437 = vmatpush1.msra.mxu0 %v409
        %438 = vmatprep.subr.mxu0 0.0
        %439 = vmatpush1.msra.mxu0 %v410
        %440 = vmatprep.subr.mxu0 0.0
        %441 = vmatpush1.msra.mxu0 %v411
        %442 = vmatprep.subr.mxu0 0.0
        %443 = vmatpush1.msra.mxu0 %v412
        %444 = vmatprep.subr.mxu0 0.0
        %445 = vmatpush1.msra.mxu0 %v413
        %446 = vmatprep.subr.mxu0 0.0
        %447 = vmatpush1.msra.mxu0 %v414
        %448 = vmatprep.subr.mxu0 0.0
        %449 = vmatpush1.msra.mxu0 %v415
        %450 = vmatprep.subr.mxu0 0.0
        %451 = vmatpush1.msra.mxu0 %v416
        %452 = vmatprep.subr.mxu0 0.0
        %453 = vmatpush1.msra.mxu0 %v417
        %454 = vmatprep.subr.mxu0 0.0
        %455 = vmatpush1.msra.mxu0 %v418
        %456 = vmatprep.subr.mxu0 0.0
        %457 = vmatpush1.msra.mxu0 %v419
        %458 = vmatprep.subr.mxu0 0.0
        %459 = vmatpush1.msra.mxu0 %v420
        %460 = vmatprep.subr.mxu0 0.0
        %461 = vmatpush1.msra.mxu0 0.0
        %462 = vmatprep.subr.mxu0 0.0
        %463 = vmatpush1.msra.mxu0 0.0
        %464 = vmatprep.subr.mxu0 0.0
        %465 = vmatpush1.msra.mxu0 0.0
        %466 = vmatprep.subr.mxu0 0.0
        %467 = vmatpush1.msra.mxu0 0.0
        %468 = vmatprep.subr.mxu0 0.0
        %469 = vmatpush1.msra.mxu0 0.0
        %470 = vmatprep.subr.mxu0 0.0
        %471 = vmatpush1.msra.mxu0 0.0
        %472 = vmatprep.subr.mxu0 0.0
        %473 = vmatpush1.msra.mxu0 0.0
        %474 = vmatprep.subr.mxu0 0.0
        %475 = vmatpush1.msra.mxu0 0.0
        %476 = vmatprep.subr.mxu0 0.0
        %477 = vmatpush1.msra.mxu0 0.0
        %478 = vmatprep.subr.mxu0 0.0
        %479 = vmatpush1.msra.mxu0 0.0
        %480 = vmatprep.subr.mxu0 0.0
        %481 = vmatpush1.msra.mxu0 0.0
        %482 = vmatprep.subr.mxu0 0.0
        %483 = vmatpush1.msra.mxu0 0.0
        %484 = vmatprep.subr.mxu0 0.0
        %485 = vmatpush1.msra.mxu0 0.0
        %486 = vmatprep.subr.mxu0 0.0
        %487 = vmatpush1.msra.mxu0 0.0
        %488 = vmatprep.subr.mxu0 0.0
        %489 = vmatpush1.msra.mxu0 0.0
        %490 = vmatprep.subr.mxu0 0.0
        %491 = vmatpush1.msra.mxu0 0.0
        %492 = vmatprep.mubr.f32.mxu0 0.0
        %493 = vmatmul.mubr.f32.gmra.mrb[0].mxu0 %v403
        %v494 = vpop.f32.mrb[0].mxu0
        %v495 = vadd.f32 %v426, %v494
        %v496 = vpop.f32.mrb[0].mxu0
        %497 = vmatprep.mubr.f32.mxu0 0.0
        %498 = vmatmul.mubr.f32.gmra.mrb[0].mxu0 %v404
        %v499 = vpop.f32.mrb[0].mxu0
        %v500 = vadd.f32 %v426, %v499
        %v501 = vpop.f32.mrb[0].mxu0
        %502 = vdwg.mxu0
        %v503 = vmax.f32 %v495, 0.0
        %v504 = vmax.f32 %v500, 0.0
        %s505 = smul.u32 %s26, 16
        %v506 = vlaneseq
        %v507 = vshrl.u32 %v506, 7
        %v508 = vadd.s32 %v507, 8
        %v509 = vstv %s505
        %v510 = vadd.s32 %v509, %v507
        %v511 = vadd.s32 %v509, %v508
        %vm512 = vcmp.lt.s32.totalorder %v510, 72
        %vm513 = vcmp.lt.s32.totalorder %v511, 72
        %v514 = vsel %vm512, %v503, 0.0
        %v515 = vsel %vm513, %v504, 0.0
        %v516 = vld [vmem:[#allocation2] sm:$0x1]
        %v517 = vadd.f32 %v514, %v515
        %v518 = vrot.slane %v517, 4
        %v519 = vadd.f32 %v517, %v518
        %v520 = vrot.slane %v519, 2
        %v521 = vadd.f32 %v519, %v520
        %v522 = vrot.slane %v521, 1
        %v523 = vadd.f32 %v521, %v522
        %v524 = vadd.f32 %v516, %v523
        %525 = vst [vmem:[#allocation2] sm:$0x1] %v524
        %p526 = scmp.eq.s32.totalorder %s26, 4
        // Predicated region
        $region81: #{tpu_custom_call.1} parent=55 // pred_check
          %p527 = pneg %p526
        $region82: #{tpu_custom_call.1} parent=55 // pred_check_branch
          %529 = sbr.rel (%p527) target = $region84
        $region83: #{tpu_custom_call.1} parent=55 // pred_region
          %v530 = vld [vmem:[#allocation2] sm:$0x1]
          %v531 = vld [vmem:[#allocation8] sm:$0xff]
          %v532 = vld [vmem:[#allocation8 + $0x8] sm:$0xff]
          %v533 = vld [vmem:[#allocation8 + $0x10] sm:$0xff]
          %v534 = vld [vmem:[#allocation8 + $0x18] sm:$0xff]
          %v535 = vld [vmem:[#allocation8 + $0x20] sm:$0xff]
          %v536 = vld [vmem:[#allocation8 + $0x28] sm:$0xff]
          %v537 = vld [vmem:[#allocation8 + $0x30] sm:$0xff]
          %v538 = vld [vmem:[#allocation8 + $0x38] sm:$0xff]
          %v539 = vld [vmem:[#allocation8 + $0x40] sm:$0xff]
          %v540 = vld [vmem:[#allocation8 + $0x48] sm:$0xff]
          %v541 = vld [vmem:[#allocation8 + $0x50] sm:$0xff]
          %v542 = vld [vmem:[#allocation8 + $0x58] sm:$0xff]
          %v543 = vld [vmem:[#allocation8 + $0x60] sm:$0xff]
          %v544 = vld [vmem:[#allocation8 + $0x68] sm:$0xff]
          %v545 = vld [vmem:[#allocation8 + $0x70] sm:$0xff]
          %v546 = vld [vmem:[#allocation8 + $0x78] sm:$0xff]
          %v547 = vld [vmem:[%s4] sm:$0x1]
          %v548 = vmul.f32 %v547, 72.0
          %549 = vmatprep.subr.mxu0 0.0
          %550 = vmatpush1.msra.mxu0 %v531
          %551 = vmatprep.subr.mxu0 0.0
          %552 = vmatpush1.msra.mxu0 %v532
          %553 = vmatprep.subr.mxu0 0.0
          %554 = vmatpush1.msra.mxu0 %v533
          %555 = vmatprep.subr.mxu0 0.0
          %556 = vmatpush1.msra.mxu0 %v534
          %557 = vmatprep.subr.mxu0 0.0
          %558 = vmatpush1.msra.mxu0 %v535
          %559 = vmatprep.subr.mxu0 0.0
          %560 = vmatpush1.msra.mxu0 %v536
          %561 = vmatprep.subr.mxu0 0.0
          %562 = vmatpush1.msra.mxu0 %v537
          %563 = vmatprep.subr.mxu0 0.0
          %564 = vmatpush1.msra.mxu0 %v538
          %565 = vmatprep.subr.mxu0 0.0
          %566 = vmatpush1.msra.mxu0 %v539
          %567 = vmatprep.subr.mxu0 0.0
          %568 = vmatpush1.msra.mxu0 %v540
          %569 = vmatprep.subr.mxu0 0.0
          %570 = vmatpush1.msra.mxu0 %v541
          %571 = vmatprep.subr.mxu0 0.0
          %572 = vmatpush1.msra.mxu0 %v542
          %573 = vmatprep.subr.mxu0 0.0
          %574 = vmatpush1.msra.mxu0 %v543
          %575 = vmatprep.subr.mxu0 0.0
          %576 = vmatpush1.msra.mxu0 %v544
          %577 = vmatprep.subr.mxu0 0.0
          %578 = vmatpush1.msra.mxu0 %v545
          %579 = vmatprep.subr.mxu0 0.0
          %580 = vmatpush1.msra.mxu0 %v546
          %581 = vmatprep.subr.mxu0 0.0
          %582 = vmatpush1.msra.mxu0 0.0
          %583 = vmatprep.subr.mxu0 0.0
          %584 = vmatpush1.msra.mxu0 0.0
          %585 = vmatprep.subr.mxu0 0.0
          %586 = vmatpush1.msra.mxu0 0.0
          %587 = vmatprep.subr.mxu0 0.0
          %588 = vmatpush1.msra.mxu0 0.0
          %589 = vmatprep.subr.mxu0 0.0
          %590 = vmatpush1.msra.mxu0 0.0
          %591 = vmatprep.subr.mxu0 0.0
          %592 = vmatpush1.msra.mxu0 0.0
          %593 = vmatprep.subr.mxu0 0.0
          %594 = vmatpush1.msra.mxu0 0.0
          %595 = vmatprep.subr.mxu0 0.0
          %596 = vmatpush1.msra.mxu0 0.0
          %597 = vmatprep.subr.mxu0 0.0
          %598 = vmatpush1.msra.mxu0 0.0
          %599 = vmatprep.subr.mxu0 0.0
          %600 = vmatpush1.msra.mxu0 0.0
          %601 = vmatprep.subr.mxu0 0.0
          %602 = vmatpush1.msra.mxu0 0.0
          %603 = vmatprep.subr.mxu0 0.0
          %604 = vmatpush1.msra.mxu0 0.0
          %605 = vmatprep.subr.mxu0 0.0
          %606 = vmatpush1.msra.mxu0 0.0
          %607 = vmatprep.subr.mxu0 0.0
          %608 = vmatpush1.msra.mxu0 0.0
          %609 = vmatprep.subr.mxu0 0.0
          %610 = vmatpush1.msra.mxu0 0.0
          %611 = vmatprep.subr.mxu0 0.0
          %612 = vmatpush1.msra.mxu0 0.0
          %613 = vmatprep.mubr.f32.mxu0 0.0
          %614 = vmatmul.mubr.f32.gmra.mrb[0].mxu0 %v530
          %v615 = vpop.f32.mrb[0].mxu0
          %v616 = vadd.f32 %v548, %v615
          %v617 = vpop.f32.mrb[0].mxu0
          %618 = vdwg.mxu0
          %v619 = vld [vmem:[#allocation9] sm:$0xff]
          %v620 = vld [vmem:[#allocation9 + $0x8] sm:$0xff]
          %v621 = vld [vmem:[#allocation9 + $0x10] sm:$0xff]
          %v622 = vld [vmem:[#allocation9 + $0x18] sm:$0xff]
          %v623 = vld [vmem:[#allocation9 + $0x20] sm:$0xff]
          %v624 = vld [vmem:[#allocation9 + $0x28] sm:$0xff]
          %v625 = vld [vmem:[#allocation9 + $0x30] sm:$0xff]
          %v626 = vld [vmem:[#allocation9 + $0x38] sm:$0xff]
          %v627 = vld [vmem:[#allocation9 + $0x40] sm:$0xff]
          %v628 = vld [vmem:[#allocation9 + $0x48] sm:$0xff]
          %v629 = vld [vmem:[#allocation9 + $0x50] sm:$0xff]
          %v630 = vld [vmem:[#allocation9 + $0x58] sm:$0xff]
          %v631 = vld [vmem:[#allocation9 + $0x60] sm:$0xff]
          %v632 = vld [vmem:[#allocation9 + $0x68] sm:$0xff]
          %v633 = vld [vmem:[#allocation9 + $0x70] sm:$0xff]
          %v634 = vld [vmem:[#allocation9 + $0x78] sm:$0xff]
          %v635 = vld [vmem:[%s6] sm:$0x1]
          %636 = vmatprep.subr.mxu0 0.0
          %637 = vmatpush1.msra.mxu0 %v619
          %638 = vmatprep.subr.mxu0 0.0
          %639 = vmatpush1.msra.mxu0 %v620
          %640 = vmatprep.subr.mxu0 0.0
          %641 = vmatpush1.msra.mxu0 %v621
          %642 = vmatprep.subr.mxu0 0.0
          %643 = vmatpush1.msra.mxu0 %v622
          %644 = vmatprep.subr.mxu0 0.0
          %645 = vmatpush1.msra.mxu0 %v623
          %646 = vmatprep.subr.mxu0 0.0
          %647 = vmatpush1.msra.mxu0 %v624
          %648 = vmatprep.subr.mxu0 0.0
          %649 = vmatpush1.msra.mxu0 %v625
          %650 = vmatprep.subr.mxu0 0.0
          %651 = vmatpush1.msra.mxu0 %v626
          %652 = vmatprep.subr.mxu0 0.0
          %653 = vmatpush1.msra.mxu0 %v627
          %654 = vmatprep.subr.mxu0 0.0
          %655 = vmatpush1.msra.mxu0 %v628
          %656 = vmatprep.subr.mxu0 0.0
          %657 = vmatpush1.msra.mxu0 %v629
          %658 = vmatprep.subr.mxu0 0.0
          %659 = vmatpush1.msra.mxu0 %v630
          %660 = vmatprep.subr.mxu0 0.0
          %661 = vmatpush1.msra.mxu0 %v631
          %662 = vmatprep.subr.mxu0 0.0
          %663 = vmatpush1.msra.mxu0 %v632
          %664 = vmatprep.subr.mxu0 0.0
          %665 = vmatpush1.msra.mxu0 %v633
          %666 = vmatprep.subr.mxu0 0.0
          %667 = vmatpush1.msra.mxu0 %v634
          %668 = vmatprep.subr.mxu0 0.0
          %669 = vmatpush1.msra.mxu0 0.0
          %670 = vmatprep.subr.mxu0 0.0
          %671 = vmatpush1.msra.mxu0 0.0
          %672 = vmatprep.subr.mxu0 0.0
          %673 = vmatpush1.msra.mxu0 0.0
          %674 = vmatprep.subr.mxu0 0.0
          %675 = vmatpush1.msra.mxu0 0.0
          %676 = vmatprep.subr.mxu0 0.0
          %677 = vmatpush1.msra.mxu0 0.0
          %678 = vmatprep.subr.mxu0 0.0
          %679 = vmatpush1.msra.mxu0 0.0
          %680 = vmatprep.subr.mxu0 0.0
          %681 = vmatpush1.msra.mxu0 0.0
          %682 = vmatprep.subr.mxu0 0.0
          %683 = vmatpush1.msra.mxu0 0.0
          %684 = vmatprep.subr.mxu0 0.0
          %685 = vmatpush1.msra.mxu0 0.0
          %686 = vmatprep.subr.mxu0 0.0
          %687 = vmatpush1.msra.mxu0 0.0
          %688 = vmatprep.subr.mxu0 0.0
          %689 = vmatpush1.msra.mxu0 0.0
          %690 = vmatprep.subr.mxu0 0.0
          %691 = vmatpush1.msra.mxu0 0.0
          %692 = vmatprep.subr.mxu0 0.0
          %693 = vmatpush1.msra.mxu0 0.0
          %694 = vmatprep.subr.mxu0 0.0
          %695 = vmatpush1.msra.mxu0 0.0
          %696 = vmatprep.subr.mxu0 0.0
          %697 = vmatpush1.msra.mxu0 0.0
          %698 = vmatprep.subr.mxu0 0.0
          %699 = vmatpush1.msra.mxu0 0.0
          %700 = vmatprep.mubr.f32.mxu0 0.0
          %701 = vmatmul.mubr.f32.gmra.mrb[0].mxu0 %v616
          %v702 = vpop.f32.mrb[0].mxu0
          %v703 = vadd.f32 %v635, %v702
          %v704 = vpop.f32.mrb[0].mxu0
          %705 = vdwg.mxu0
          %v706 = vmax.f32 %v703, 0.0
          %v707 = vld [vmem:[#allocation11] sm:$0xff]
          %v708 = vld [vmem:[#allocation11 + $0x8] sm:$0xff]
          %v709 = vld [vmem:[#allocation11 + $0x10] sm:$0xff]
          %v710 = vld [vmem:[#allocation11 + $0x18] sm:$0xff]
          %v711 = vld [vmem:[#allocation11 + $0x20] sm:$0xff]
          %v712 = vld [vmem:[#allocation11 + $0x28] sm:$0xff]
          %v713 = vld [vmem:[#allocation11 + $0x30] sm:$0xff]
          %v714 = vld [vmem:[#allocation11 + $0x38] sm:$0xff]
          %v715 = vld [vmem:[#allocation11 + $0x40] sm:$0xff]
          %v716 = vld [vmem:[#allocation11 + $0x48] sm:$0xff]
          %v717 = vld [vmem:[#allocation11 + $0x50] sm:$0xff]
          %v718 = vld [vmem:[#allocation11 + $0x58] sm:$0xff]
          %v719 = vld [vmem:[#allocation11 + $0x60] sm:$0xff]
          %v720 = vld [vmem:[#allocation11 + $0x68] sm:$0xff]
          %v721 = vld [vmem:[#allocation11 + $0x70] sm:$0xff]
          %v722 = vld [vmem:[#allocation11 + $0x78] sm:$0xff]
          %v723 = vld [vmem:[%s8] sm:$0x1]
          %724 = vmatprep.subr.mxu0 0.0
          %725 = vmatpush1.msra.mxu0 %v707
          %726 = vmatprep.subr.mxu0 0.0
          %727 = vmatpush1.msra.mxu0 %v708
          %728 = vmatprep.subr.mxu0 0.0
          %729 = vmatpush1.msra.mxu0 %v709
          %730 = vmatprep.subr.mxu0 0.0
          %731 = vmatpush1.msra.mxu0 %v710
          %732 = vmatprep.subr.mxu0 0.0
          %733 = vmatpush1.msra.mxu0 %v711
          %734 = vmatprep.subr.mxu0 0.0
          %735 = vmatpush1.msra.mxu0 %v712
          %736 = vmatprep.subr.mxu0 0.0
          %737 = vmatpush1.msra.mxu0 %v713
          %738 = vmatprep.subr.mxu0 0.0
          %739 = vmatpush1.msra.mxu0 %v714
          %740 = vmatprep.subr.mxu0 0.0
          %741 = vmatpush1.msra.mxu0 %v715
          %742 = vmatprep.subr.mxu0 0.0
          %743 = vmatpush1.msra.mxu0 %v716
          %744 = vmatprep.subr.mxu0 0.0
          %745 = vmatpush1.msra.mxu0 %v717
          %746 = vmatprep.subr.mxu0 0.0
          %747 = vmatpush1.msra.mxu0 %v718
          %748 = vmatprep.subr.mxu0 0.0
          %749 = vmatpush1.msra.mxu0 %v719
          %750 = vmatprep.subr.mxu0 0.0
          %751 = vmatpush1.msra.mxu0 %v720
          %752 = vmatprep.subr.mxu0 0.0
          %753 = vmatpush1.msra.mxu0 %v721
          %754 = vmatprep.subr.mxu0 0.0
          %755 = vmatpush1.msra.mxu0 %v722
          %756 = vmatprep.subr.mxu0 0.0
          %757 = vmatpush1.msra.mxu0 0.0
          %758 = vmatprep.subr.mxu0 0.0
          %759 = vmatpush1.msra.mxu0 0.0
          %760 = vmatprep.subr.mxu0 0.0
          %761 = vmatpush1.msra.mxu0 0.0
          %762 = vmatprep.subr.mxu0 0.0
          %763 = vmatpush1.msra.mxu0 0.0
          %764 = vmatprep.subr.mxu0 0.0
          %765 = vmatpush1.msra.mxu0 0.0
          %766 = vmatprep.subr.mxu0 0.0
          %767 = vmatpush1.msra.mxu0 0.0
          %768 = vmatprep.subr.mxu0 0.0
          %769 = vmatpush1.msra.mxu0 0.0
          %770 = vmatprep.subr.mxu0 0.0
          %771 = vmatpush1.msra.mxu0 0.0
          %772 = vmatprep.subr.mxu0 0.0
          %773 = vmatpush1.msra.mxu0 0.0
          %774 = vmatprep.subr.mxu0 0.0
          %775 = vmatpush1.msra.mxu0 0.0
          %776 = vmatprep.subr.mxu0 0.0
          %777 = vmatpush1.msra.mxu0 0.0
          %778 = vmatprep.subr.mxu0 0.0
          %779 = vmatpush1.msra.mxu0 0.0
          %780 = vmatprep.subr.mxu0 0.0
          %781 = vmatpush1.msra.mxu0 0.0
          %782 = vmatprep.subr.mxu0 0.0
          %783 = vmatpush1.msra.mxu0 0.0
          %784 = vmatprep.subr.mxu0 0.0
          %785 = vmatpush1.msra.mxu0 0.0
          %786 = vmatprep.subr.mxu0 0.0
          %787 = vmatpush1.msra.mxu0 0.0
          %788 = vmatprep.mubr.f32.mxu0 0.0
          %789 = vmatmul.mubr.f32.gmra.mrb[0].mxu0 %v706
          %v790 = vpop.f32.mrb[0].mxu0
          %v791 = vadd.f32 %v723, %v790
          %v792 = vpop.f32.mrb[0].mxu0
          %793 = vdwg.mxu0
          %794 = vst [vmem:[#allocation12] sm:$0x1] %v791
        $region84: #{tpu_custom_call.1} parent=55 // pred_fallthru
          _
        // Predicated region
        $region85: #{tpu_custom_call.1} parent=55 // pred_check
          %p795 = pneg %p233
        $region86: #{tpu_custom_call.1} parent=55 // pred_check_branch
          %797 = sbr.rel (%p795) target = $region88
        $region87: #{tpu_custom_call.1} parent=55 // pred_region
          %s799 = ssub.s32 16, 16
          %800 = vsyncadd [#allocation5], %s799
          %s802 = sshll.u32 [#allocation12], 4
          %s803 = int_to_ptr.vmem [resolvable:$true] %s802
          %805 = dma.vmem_to_hbm [thread:$0]  %s803, 16, %s9, [#allocation5]
        $region88: #{tpu_custom_call.1} parent=55 // pred_fallthru
          _
        // Predicated region
        $region89: #{tpu_custom_call.1} parent=55 // pred_check
          %p806 = pneg %p233
        $region90: #{tpu_custom_call.1} parent=55 // pred_check_branch
          %808 = sbr.rel (%p806) target = $region92
        $region91: #{tpu_custom_call.1} parent=55 // pred_region
          %809 = dma.done [#allocation5], 16
        $region92: #{tpu_custom_call.1} parent=55 // pred_fallthru
          _
      $region56: #{tpu_custom_call.1} parent=5 // pred_fallthru
        _
      %p810 = scmp.le.s32.totalorder 2, %s21
      // Predicated region
      $region93: #{tpu_custom_call.1} parent=5 // pred_check
        %p811 = pneg %p810
      $region94: #{tpu_custom_call.1} parent=5 // pred_check_branch
        %813 = sbr.rel (%p811) target = $region96
      $region95: #{tpu_custom_call.1} parent=5 // pred_region
        %s814 = ssub.s32 %s21, 2
      $region96: #{tpu_custom_call.1} parent=5 // pred_fallthru
        _
    $region6: #{tpu_custom_call.1} parent=1 // loop_footer
      %s25 = sadd.s32 1, %s21
    $region7: #{tpu_custom_call.1} parent=1 // loop_footer_branch
      %20 = sbr.rel target = $region3
    $region8: #{tpu_custom_call.1} parent=1 // loop_exit
      _
    %815 = vsyncpa [#allocation4], 1
    %s816 = scalar_lea.sflag [#allocation4], 1
    %817 = vsyncpa %s816, 1
    %818 = vsyncpa [#allocation7], 1
    %819 = vsyncpa [#allocation10], 1
    %820 = vsyncpa [#allocation5], 1
    %s821 = scalar_lea.sflag [#allocation5], 1
    %822 = vsyncpa %s821, 1

</llo_original>
